<compile_context>
chip_gen: v7x
topology: tpu7x:2x2x1
jax: 0.10.0
libtpu: 0.0.40
codegen_flags: <defaults>
</compile_context>

<pallas_src>
import functools

import jax
import jax.numpy as jnp
from jax.experimental import pallas as pl
from jax.experimental.pallas import tpu as pltpu

_LANE = 128
_SUBLANE = 8


def _round_up(x, m):
    return ((x + m - 1) // m) * m


def _fcn_kernel(x_ref, w_ref, b_ref, out_ref, *, d_pad, lane_pad):
    """One batch-tile of the FCN forward.

    x_ref  : (TB, d_pad)          bf16, flattened + lane-padded input tile
    w_ref  : (d_pad + 2*W, W)     bf16, [toeplitz ; w1 ; w2] stacked along rows
    b_ref  : (3, W)               f32,  rows = [conv_bias ; b1 ; b2]
    out_ref: (TB, W)              f32,  lane-dense; wrapper slices [:, :label_dim]
    """
    t = w_ref[0:d_pad, :]                                   # fused Conv1d+Flatten
    w1 = w_ref[d_pad:d_pad + lane_pad, :]                   # Linear(F -> NF)
    w2 = w_ref[d_pad + lane_pad:d_pad + 2 * lane_pad, :]    # Linear(NF -> label_dim)

    # Conv1d (valid, stride 1) + Flatten as ONE bf16 MXU matmul, f32 accumulation.
    a = jnp.dot(x_ref[...], t, preferred_element_type=jnp.float32) + b_ref[0:1, :]
    a = jnp.maximum(a, 0.0)                                  # ReLU (f32 on VPU)
    h = jnp.dot(a.astype(jnp.bfloat16), w1,
                preferred_element_type=jnp.float32) + b_ref[1:2, :]
    h = jnp.maximum(h, 0.0)                                  # ReLU
    out_ref[...] = jnp.dot(h.astype(jnp.bfloat16), w2,
                           preferred_element_type=jnp.float32) + b_ref[2:3, :]


def prepare_fcn_params(conv_w, conv_b, w1, b1, w2, b2, seq_len):
    """One-time parameter re-layout (do this at init, NOT per forward call).

    conv_w: (C_out, C_in, K)   PyTorch Conv1d weight
    conv_b: (C_out,)
    w1    : (NF, C_out*L_out)  PyTorch Linear weight (out, in)
    b1    : (NF,)
    w2    : (label_dim, NF)
    b2    : (label_dim,)
    """
    c_out, c_in, k = conv_w.shape
    l_out = seq_len - k + 1
    f_dim = c_out * l_out
    num_filter = w1.shape[0]
    label_dim = w2.shape[0]
    d_in = c_in * seq_len
    assert w1.shape[1] == f_dim, "nullspace.shape[0] must equal C_out*(L-K+1)"

    d_pad = _round_up(d_in, _LANE)
    # Common lane width for all intermediate / output dims (F, NF, label_dim).
    lane_pad = _round_up(max(f_dim, num_filter, label_dim), _LANE)

    # --- Fuse Conv1d + Flatten into a block-Toeplitz matrix T so that
    #     flat_conv[n, co*L_out + l] = sum_{ci,t} x[n, ci, t] * T[ci*L + t, co*L_out + l]
    #     with T[ci*L + t, co*L_out + l] = conv_w[co, ci, t - l] for 0 <= t-l < K.
    t_idx = jnp.arange(seq_len)[:, None]          # (L, 1)
    l_idx = jnp.arange(l_out)[None, :]            # (1, L_out)
    kk = t_idx - l_idx                            # (L, L_out)
    valid = (kk >= 0) & (kk < k)
    w_ic = jnp.transpose(conv_w, (1, 0, 2)).astype(jnp.float32)   # (C_in, C_out, K)
    blocks = jnp.where(valid[None, None],
                       w_ic[:, :, jnp.clip(kk, 0, k - 1)], 0.0)   # (C_in, C_out, L, L_out)
    toeplitz = jnp.transpose(blocks, (0, 2, 1, 3)).reshape(d_in, f_dim)

    # Zero-pad every matrix to lane-dense shapes.
    t_pad = jnp.zeros((d_pad, lane_pad), jnp.float32).at[:d_in, :f_dim].set(toeplitz)
    w1_pad = jnp.zeros((lane_pad, lane_pad), jnp.float32)
    w1_pad = w1_pad.at[:f_dim, :num_filter].set(jnp.transpose(w1).astype(jnp.float32))
    w2_pad = jnp.zeros((lane_pad, lane_pad), jnp.float32)
    w2_pad = w2_pad.at[:num_filter, :label_dim].set(jnp.transpose(w2).astype(jnp.float32))

    # Single bf16 weight slab: [toeplitz ; w1 ; w2] stacked along rows -> one DMA.
    weights = jnp.concatenate([t_pad, w1_pad, w2_pad], axis=0).astype(jnp.bfloat16)

    # Single f32 bias slab: row 0 = conv bias (broadcast along L_out), 1 = b1, 2 = b2.
    biases = jnp.zeros((3, lane_pad), jnp.float32)
    cb_flat = jnp.broadcast_to(conv_b.astype(jnp.float32)[:, None],
                               (c_out, l_out)).reshape(f_dim)
    biases = biases.at[0, :f_dim].set(cb_flat)
    biases = biases.at[1, :num_filter].set(b1.astype(jnp.float32))
    biases = biases.at[2, :label_dim].set(b2.astype(jnp.float32))

    return dict(weights=weights, biases=biases,
                d_in=d_in, d_pad=d_pad, lane_pad=lane_pad, label_dim=label_dim)


def fcn_forward(x, params, *, batch_tile=512):
    """x: (N, C_in, L) in PyTorch NCL layout; params from prepare_fcn_params().

    batch_tile: rows per grid step. Multiple of 256 fills the v6e/v7x MXU; 512
    double-buffered is ~1 MiB of VMEM, safely under v5e's 16 MiB / v7x's 32 MiB
    scoped defaults.
    """
    n = x.shape[0]
    d_in, d_pad = params["d_in"], params["d_pad"]
    lane_pad = params["lane_pad"]
    assert x.shape[1] * x.shape[2] == d_in

    tb = min(batch_tile, _round_up(n, _SUBLANE))   # full (8,128) sublane tiles
    n_pad = _round_up(n, tb)

    x_flat = x.reshape(n, d_in).astype(jnp.bfloat16)
    x_pad = jnp.zeros((n_pad, d_pad), jnp.bfloat16).at[:n, :d_in].set(x_flat)

    kernel = functools.partial(_fcn_kernel, d_pad=d_pad, lane_pad=lane_pad)

    w_shape = params["weights"].shape
    b_shape = params["biases"].shape
    flops = 2 * n_pad * (d_pad * lane_pad + 2 * lane_pad * lane_pad)
    bytes_accessed = (n_pad * d_pad * 2 + n_pad * lane_pad * 4
                      + w_shape[0] * w_shape[1] * 2 + b_shape[0] * b_shape[1] * 4)

    out_pad = pl.pallas_call(
        kernel,
        out_shape=jax.ShapeDtypeStruct((n_pad, lane_pad), jnp.float32),
        grid=(n_pad // tb,),
        in_specs=[
            # x tile streams over the batch grid (double-buffered by the pipeline).
            pl.BlockSpec((tb, d_pad), lambda i: (i, 0)),
            # Weight / bias slabs: constant block index -> stay VMEM-resident.
            pl.BlockSpec(w_shape, lambda i: (0, 0)),
            pl.BlockSpec(b_shape, lambda i: (0, 0)),
        ],
        out_specs=pl.BlockSpec((tb, lane_pad), lambda i: (i, 0)),
        compiler_params=pltpu.CompilerParams(
            dimension_semantics=("parallel",),   # megacore / 2-TC batch split
            vmem_limit_bytes=32 * 1024 * 1024,   # generous vs ~2 MiB actual use
        ),
        cost_estimate=pl.CostEstimate(flops=flops, transcendentals=0,
                                      bytes_accessed=bytes_accessed),
    )(x_pad, params["weights"], params["biases"])
    return out_pad[:n, :params["label_dim"]]


def fcn_reference(x, conv_w, conv_b, w1, b1, w2, b2):
    """Pure-JAX f32 reference mirroring the PyTorch forward."""
    conv = jax.lax.conv_general_dilated(
        x, conv_w, window_strides=(1,), padding="VALID",
        dimension_numbers=("NCH", "OIH", "NCH"))
    conv = jax.nn.relu(conv + conv_b[None, :, None])
    flat = conv.reshape(conv.shape[0], -1)
    h = jax.nn.relu(flat @ w1.T + b1)
    return h @ w2.T + b2


if __name__ == "__main__":
    # Shapes consistent with the module: FCN(in_c=4, out_c=4,
    # nullspace of shape (56, 5), label_dim=3, kernel=3, num_filter=8, layer=2).
    N, C_IN, L = 2, 4, 16
    C_OUT, K = 4, 3
    L_OUT = L - K + 1                       # 14
    F = C_OUT * L_OUT                       # 56 == nullspace.shape[0]
    NUM_FILTER, LABEL_DIM = 8, 3

    key = jax.random.PRNGKey(0)
    kx, kcw, kcb, kw1, kb1, kw2, kb2 = jax.random.split(key, 7)

    x = jax.random.normal(kx, (N, C_IN, L), jnp.float32)
    conv_w = 0.1 * jax.random.normal(kcw, (C_OUT, C_IN, K), jnp.float32)
    conv_b = 0.1 * jax.random.normal(kcb, (C_OUT,), jnp.float32)
    w1 = 0.1 * jax.random.normal(kw1, (NUM_FILTER, F), jnp.float32)
    b1 = 0.1 * jax.random.normal(kb1, (NUM_FILTER,), jnp.float32)
    w2 = 0.1 * jax.random.normal(kw2, (LABEL_DIM, NUM_FILTER), jnp.float32)
    b2 = 0.1 * jax.random.normal(kb2, (LABEL_DIM,), jnp.float32)

    # Parameter re-layout done ONCE (hoisted out of the per-call path).
    params = prepare_fcn_params(conv_w, conv_b, w1, b1, w2, b2, L)
    jax.block_until_ready((params["weights"], params["biases"]))

    out = jax.block_until_ready(fcn_forward(x, params))
    ref = fcn_reference(x, conv_w, conv_b, w1, b1, w2, b2)

    assert out.shape == (N, LABEL_DIM), out.shape
    # bf16 weight/input storage (f32 accumulation) vs the f32 reference: loose tol.
    assert jnp.allclose(out, ref, atol=3e-2, rtol=3e-2), (out, ref)

    # TODO(synk): if bit-closeness to the PyTorch f32 forward is required, keep the
    # slabs f32 and pass precision=jax.lax.Precision.HIGHEST to the dots.
    print("KERNEL_OK")
</pallas_src>

<mosaic_0001>
module attributes {stable_mosaic.version = 11 : i64} {
  func.func @_fcn_kernel(%arg0: i32, %arg1: memref<8x128xbf16, #tpu.memory_space<vmem>>, %arg2: memref<384x128xbf16, #tpu.memory_space<vmem>>, %arg3: memref<3x128xf32, #tpu.memory_space<vmem>>, %arg4: memref<8x128xf32, #tpu.memory_space<vmem>>) attributes {dimension_semantics = [#tpu.dimension_semantics<parallel>], iteration_bounds = array<i64: 1>, scalar_prefetch = 0 : i64, scratch_operands = 0 : i64, tpu.core_type = #tpu.core_type<tc>, window_params = [{transform_indices = @transform_0, window_bounds = array<i64: 8, 128>}, {pipeline_mode = #tpu.pipeline_mode<synchronous>, transform_indices = @transform_1, window_bounds = array<i64: 384, 128>}, {pipeline_mode = #tpu.pipeline_mode<synchronous>, transform_indices = @transform_2, window_bounds = array<i64: 3, 128>}, {transform_indices = @transform_3, window_bounds = array<i64: 8, 128>}]} {
    %c0 = arith.constant 0 : index
    %c0_0 = arith.constant 0 : index
    %0 = vector.load %arg2[%c0, %c0_0] : memref<384x128xbf16, #tpu.memory_space<vmem>>, vector<128x128xbf16>
    %c128 = arith.constant 128 : index
    %c0_1 = arith.constant 0 : index
    %1 = vector.load %arg2[%c128, %c0_1] : memref<384x128xbf16, #tpu.memory_space<vmem>>, vector<128x128xbf16>
    %c256 = arith.constant 256 : index
    %c0_2 = arith.constant 0 : index
    %2 = vector.load %arg2[%c256, %c0_2] : memref<384x128xbf16, #tpu.memory_space<vmem>>, vector<128x128xbf16>
    %c0_3 = arith.constant 0 : index
    %c0_4 = arith.constant 0 : index
    %3 = vector.load %arg1[%c0_3, %c0_4] : memref<8x128xbf16, #tpu.memory_space<vmem>>, vector<8x128xbf16>
    %cst = arith.constant dense<0.000000e+00> : vector<8x128xf32>
    %4 = tpu.matmul %3, %0, %cst {dimension_numbers = #tpu.dot_dimension_numbers<[1], [0], [0], [1], [0, 0, 1, 1], [], []>} : vector<8x128xbf16>, vector<128x128xbf16>, vector<8x128xf32> -> vector<8x128xf32>
    %c0_5 = arith.constant 0 : index
    %c0_6 = arith.constant 0 : index
    %5 = vector.load %arg3[%c0_5, %c0_6] : memref<3x128xf32, #tpu.memory_space<vmem>>, vector<1x128xf32>
    %6 = vector.broadcast %5 : vector<1x128xf32> to vector<8x128xf32>
    %7 = arith.addf %4, %6 : vector<8x128xf32>
    %cst_7 = arith.constant 0.000000e+00 : f32
    %8 = vector.broadcast %cst_7 : f32 to vector<8x128xf32>
    %9 = arith.maximumf %7, %8 : vector<8x128xf32>
    %10 = arith.truncf %9 : vector<8x128xf32> to vector<8x128xbf16>
    %cst_8 = arith.constant dense<0.000000e+00> : vector<8x128xf32>
    %11 = tpu.matmul %10, %1, %cst_8 {dimension_numbers = #tpu.dot_dimension_numbers<[1], [0], [0], [1], [0, 0, 1, 1], [], []>} : vector<8x128xbf16>, vector<128x128xbf16>, vector<8x128xf32> -> vector<8x128xf32>
    %c1 = arith.constant 1 : index
    %c0_9 = arith.constant 0 : index
    %12 = vector.load %arg3[%c1, %c0_9] : memref<3x128xf32, #tpu.memory_space<vmem>>, vector<1x128xf32>
    %13 = vector.broadcast %12 : vector<1x128xf32> to vector<8x128xf32>
    %14 = arith.addf %11, %13 : vector<8x128xf32>
    %cst_10 = arith.constant 0.000000e+00 : f32
    %15 = vector.broadcast %cst_10 : f32 to vector<8x128xf32>
    %16 = arith.maximumf %14, %15 : vector<8x128xf32>
    %17 = arith.truncf %16 : vector<8x128xf32> to vector<8x128xbf16>
    %cst_11 = arith.constant dense<0.000000e+00> : vector<8x128xf32>
    %18 = tpu.matmul %17, %2, %cst_11 {dimension_numbers = #tpu.dot_dimension_numbers<[1], [0], [0], [1], [0, 0, 1, 1], [], []>} : vector<8x128xbf16>, vector<128x128xbf16>, vector<8x128xf32> -> vector<8x128xf32>
    %c2 = arith.constant 2 : index
    %c0_12 = arith.constant 0 : index
    %19 = vector.load %arg3[%c2, %c0_12] : memref<3x128xf32, #tpu.memory_space<vmem>>, vector<1x128xf32>
    %20 = vector.broadcast %19 : vector<1x128xf32> to vector<8x128xf32>
    %21 = arith.addf %18, %20 : vector<8x128xf32>
    %c0_13 = arith.constant 0 : index
    %c0_14 = arith.constant 0 : index
    %22 = vector.load %arg4[%c0_13, %c0_14] : memref<8x128xf32, #tpu.memory_space<vmem>>, vector<8x128xf32>
    tpu.vector_store %arg4[%c0_13, %c0_14], %21 {strides = array<i32>} : memref<8x128xf32, #tpu.memory_space<vmem>>, vector<8x128xf32>,
    return
  }
  func.func @transform_0(%arg0: i32) -> (i32, i32) {
    %c0_i32 = arith.constant 0 : i32
    %c0_i32_0 = arith.constant 0 : i32
    return %arg0, %c0_i32 : i32, i32
  }
  func.func @transform_1(%arg0: i32) -> (i32, i32) {
    %c0_i32 = arith.constant 0 : i32
    %c0_i32_0 = arith.constant 0 : i32
    %c0_i32_1 = arith.constant 0 : i32
    return %c0_i32, %c0_i32_0 : i32, i32
  }
  func.func @transform_2(%arg0: i32) -> (i32, i32) {
    %c0_i32 = arith.constant 0 : i32
    %c0_i32_0 = arith.constant 0 : i32
    %c0_i32_1 = arith.constant 0 : i32
    return %c0_i32, %c0_i32_0 : i32, i32
  }
  func.func @transform_3(%arg0: i32) -> (i32, i32) {
    %c0_i32 = arith.constant 0 : i32
    %c0_i32_0 = arith.constant 0 : i32
    return %arg0, %c0_i32 : i32, i32
  }
}

</mosaic_0001>

<llo_original>
// kernel: tpu_custom_call.1
$region0: #{tpu_custom_call.1}
  #allocation0 [shape = 'u32[]', space=smem, size = 0x4, offset = 0x4, fixed_abs, tag = 'smem constant byte address 0x4 - core index']
  #allocation1 [shape = 'u32[144,128]{1,0:T(1,128)}', space=vmem, size = 0x12000, scoped, tag = 'internal scratch']
  %s0 = inlined_call_operand.hbm [shape: bf16[8,128], index: 0, kind: input, shape index: {}]
  %s1 = inlined_call_operand.hbm [shape: bf16[384,128], index: 1, kind: input, shape index: {}]
  %s2 = inlined_call_operand.vmem [shape: f32[3,128], index: 2, kind: input, shape index: {}]
  %s3 = inlined_call_operand.hbm [shape: f32[8,128], index: 3, kind: output, shape index: {}]
  %s4 = sld [smem:[#allocation0]]
  $region30: #{tpu_custom_call.1} parent=0
    _
  %s6 = ssub.s32 1, %s4
  %s7 = scalar_select 0, %s6, %s4
  $region1: #{tpu_custom_call.1} parent=0
    #allocation2 [shape = 'u8[2048]{0}', space=vmem, size = 0x800, scoped, tag = 'input window, operand 0, single buffered']
    #allocation3 [shape = 's32[1]{0}', space=sflag, size = 0x4, scoped, tag = 'scoped memory for tpu_custom_call.1']
    #allocation4 [shape = 's32[1]{0}', space=sflag, size = 0x4, scoped, tag = 'scoped memory for tpu_custom_call.1']
    #allocation5 [shape = 'u8[98304]{0}', space=vmem, size = 0x18000, scoped, tag = 'input window, operand 1, single buffered']
    #allocation6 [shape = 's32[1]{0}', space=sflag, size = 0x4, scoped, tag = 'scoped memory for tpu_custom_call.1']
    #allocation7 [shape = 'u8[4096]{0}', space=vmem, size = 0x1000, scoped, tag = 'output window, operand 0, single buffered']
    %8 = vsyncpa [#allocation3], 0
    %9 = vsyncpa [#allocation6], 0
    %10 = vsyncpa [#allocation4], 0
    // Predicated region
    $region2: #{tpu_custom_call.1} parent=1 // pred_check
      _
    $region3: #{tpu_custom_call.1} parent=1 // pred_check_branch
      %12 = sbr.rel (0) target = $region5
    $region4: #{tpu_custom_call.1} parent=1 // pred_region
      %s14 = ssub.s32 64, 64
      %15 = vsyncadd [#allocation3], %s14
      %s17 = sshll.u32 [#allocation2], 4
      %s18 = int_to_ptr.vmem [resolvable:$true] %s17
      %20 = dma.hbm_to_vmem [thread:$0]  %s0, 64, %s18, [#allocation3]
    $region5: #{tpu_custom_call.1} parent=1 // pred_fallthru
      _
    // Predicated region
    $region6: #{tpu_custom_call.1} parent=1 // pred_check
      _
    $region7: #{tpu_custom_call.1} parent=1 // pred_check_branch
      %22 = sbr.rel (0) target = $region9
    $region8: #{tpu_custom_call.1} parent=1 // pred_region
      %s24 = ssub.s32 3072, 3072
      %25 = vsyncadd [#allocation6], %s24
      %s26 = sshll.u32 [#allocation5], 4
      %s27 = int_to_ptr.vmem [resolvable:$true] %s26
      %32 = dma.hbm_to_vmem [thread:$0]  %s1, 3072, %s27, [#allocation6], 64, 64, 4
    $region9: #{tpu_custom_call.1} parent=1 // pred_fallthru
      _
    // Predicated region
    $region10: #{tpu_custom_call.1} parent=1 // pred_check
      _
    $region11: #{tpu_custom_call.1} parent=1 // pred_check_branch
      %34 = sbr.rel (0) target = $region13
    $region12: #{tpu_custom_call.1} parent=1 // pred_region
      _
    $region13: #{tpu_custom_call.1} parent=1 // pred_fallthru
      _
    // Predicated region
    $region14: #{tpu_custom_call.1} parent=1 // pred_check
      _
    $region15: #{tpu_custom_call.1} parent=1 // pred_check_branch
      %36 = sbr.rel (0) target = $region17
    $region16: #{tpu_custom_call.1} parent=1 // pred_region
      %37 = dma.done [#allocation3], 64
    $region17: #{tpu_custom_call.1} parent=1 // pred_fallthru
      _
    // Predicated region
    $region18: #{tpu_custom_call.1} parent=1 // pred_check
      _
    $region19: #{tpu_custom_call.1} parent=1 // pred_check_branch
      %39 = sbr.rel (0) target = $region21
    $region20: #{tpu_custom_call.1} parent=1 // pred_region
      %40 = dma.done [#allocation6], 3072
    $region21: #{tpu_custom_call.1} parent=1 // pred_fallthru
      _
    %v42 = vld [vmem:[#allocation5] sm:$0xf]
    %v43 = vld [vmem:[#allocation5 + $0x4] sm:$0xf]
    %v44 = vld [vmem:[#allocation5 + $0x8] sm:$0xf]
    %v45 = vld [vmem:[#allocation5 + $0xc] sm:$0xf]
    %v46 = vld [vmem:[#allocation5 + $0x10] sm:$0xf]
    %v47 = vld [vmem:[#allocation5 + $0x14] sm:$0xf]
    %v48 = vld [vmem:[#allocation5 + $0x18] sm:$0xf]
    %v49 = vld [vmem:[#allocation5 + $0x1c] sm:$0xf]
    %v50 = vld [vmem:[#allocation5 + $0x20] sm:$0xf]
    %v51 = vld [vmem:[#allocation5 + $0x24] sm:$0xf]
    %v52 = vld [vmem:[#allocation5 + $0x28] sm:$0xf]
    %v53 = vld [vmem:[#allocation5 + $0x2c] sm:$0xf]
    %v54 = vld [vmem:[#allocation5 + $0x30] sm:$0xf]
    %v55 = vld [vmem:[#allocation5 + $0x34] sm:$0xf]
    %v56 = vld [vmem:[#allocation5 + $0x38] sm:$0xf]
    %v57 = vld [vmem:[#allocation5 + $0x3c] sm:$0xf]
    %v58 = vld [vmem:[#allocation5 + $0x40] sm:$0xf]
    %v59 = vld [vmem:[#allocation5 + $0x44] sm:$0xf]
    %v60 = vld [vmem:[#allocation5 + $0x48] sm:$0xf]
    %v61 = vld [vmem:[#allocation5 + $0x4c] sm:$0xf]
    %v62 = vld [vmem:[#allocation5 + $0x50] sm:$0xf]
    %v63 = vld [vmem:[#allocation5 + $0x54] sm:$0xf]
    %v64 = vld [vmem:[#allocation5 + $0x58] sm:$0xf]
    %v65 = vld [vmem:[#allocation5 + $0x5c] sm:$0xf]
    %v66 = vld [vmem:[#allocation5 + $0x60] sm:$0xf]
    %v67 = vld [vmem:[#allocation5 + $0x64] sm:$0xf]
    %v68 = vld [vmem:[#allocation5 + $0x68] sm:$0xf]
    %v69 = vld [vmem:[#allocation5 + $0x6c] sm:$0xf]
    %v70 = vld [vmem:[#allocation5 + $0x70] sm:$0xf]
    %v71 = vld [vmem:[#allocation5 + $0x74] sm:$0xf]
    %v72 = vld [vmem:[#allocation5 + $0x78] sm:$0xf]
    %v73 = vld [vmem:[#allocation5 + $0x7c] sm:$0xf]
    %v74 = vld [vmem:[#allocation5 + $0x80] sm:$0xf]
    %v75 = vld [vmem:[#allocation5 + $0x84] sm:$0xf]
    %v76 = vld [vmem:[#allocation5 + $0x88] sm:$0xf]
    %v77 = vld [vmem:[#allocation5 + $0x8c] sm:$0xf]
    %v78 = vld [vmem:[#allocation5 + $0x90] sm:$0xf]
    %v79 = vld [vmem:[#allocation5 + $0x94] sm:$0xf]
    %v80 = vld [vmem:[#allocation5 + $0x98] sm:$0xf]
    %v81 = vld [vmem:[#allocation5 + $0x9c] sm:$0xf]
    %v82 = vld [vmem:[#allocation5 + $0xa0] sm:$0xf]
    %v83 = vld [vmem:[#allocation5 + $0xa4] sm:$0xf]
    %v84 = vld [vmem:[#allocation5 + $0xa8] sm:$0xf]
    %v85 = vld [vmem:[#allocation5 + $0xac] sm:$0xf]
    %v86 = vld [vmem:[#allocation5 + $0xb0] sm:$0xf]
    %v87 = vld [vmem:[#allocation5 + $0xb4] sm:$0xf]
    %v88 = vld [vmem:[#allocation5 + $0xb8] sm:$0xf]
    %v89 = vld [vmem:[#allocation5 + $0xbc] sm:$0xf]
    %v90 = vld [vmem:[#allocation2] sm:$0xf]
    %v91 = vld [vmem:[%s2] sm:$0x1]
    %v92 = vlaneseq
    %v93 = vshrl.u32 %v92, 7
    %v94 = vsub.s32 0, %v93
    %v95 = vrot.slane %v91, %v94
    %v112 = vunpack.c.l.b16 %v42
    %v113 = vunpack.c.l.b16 %v43
    %v114 = vunpack.c.l.b16 %v44
    %v115 = vunpack.c.l.b16 %v45
    %v116 = vunpack.c.l.b16 %v46
    %v117 = vunpack.c.l.b16 %v47
    %v118 = vunpack.c.l.b16 %v48
    %v119 = vunpack.c.l.b16 %v49
    %v120 = vunpack.c.l.b16 %v50
    %v121 = vunpack.c.l.b16 %v51
    %v122 = vunpack.c.l.b16 %v52
    %v123 = vunpack.c.l.b16 %v53
    %v124 = vunpack.c.l.b16 %v54
    %v125 = vunpack.c.l.b16 %v55
    %v126 = vunpack.c.l.b16 %v56
    %v127 = vunpack.c.l.b16 %v57
    %v128 = vpack.c.b16 %v113, %v112
    %v129 = vpack.c.b16 %v115, %v114
    %v130 = vpack.c.b16 %v117, %v116
    %v131 = vpack.c.b16 %v119, %v118
    %v132 = vpack.c.b16 %v121, %v120
    %v133 = vpack.c.b16 %v123, %v122
    %v134 = vpack.c.b16 %v125, %v124
    %v135 = vpack.c.b16 %v127, %v126
    %144 = vmatprep.subr.bf16.mxu0 0
    %145 = vmatpush1.bf16.msra.mxu0 %v128
    %146 = vmatprep.subr.bf16.mxu0 0
    %147 = vmatpush1.bf16.msra.mxu0 %v129
    %148 = vmatprep.subr.bf16.mxu0 0
    %149 = vmatpush1.bf16.msra.mxu0 %v130
    %150 = vmatprep.subr.bf16.mxu0 0
    %151 = vmatpush1.bf16.msra.mxu0 %v131
    %152 = vmatprep.subr.bf16.mxu0 0
    %153 = vmatpush1.bf16.msra.mxu0 %v132
    %154 = vmatprep.subr.bf16.mxu0 0
    %155 = vmatpush1.bf16.msra.mxu0 %v133
    %156 = vmatprep.subr.bf16.mxu0 0
    %157 = vmatpush1.bf16.msra.mxu0 %v134
    %158 = vmatprep.subr.bf16.mxu0 0
    %159 = vmatpush1.bf16.msra.mxu0 %v135
    %160 = vmatprep.subr.bf16.mxu0 0
    %161 = vmatpush1.bf16.msra.mxu0 0
    %162 = vmatprep.subr.bf16.mxu0 0
    %163 = vmatpush1.bf16.msra.mxu0 0
    %164 = vmatprep.subr.bf16.mxu0 0
    %165 = vmatpush1.bf16.msra.mxu0 0
    %166 = vmatprep.subr.bf16.mxu0 0
    %167 = vmatpush1.bf16.msra.mxu0 0
    %168 = vmatprep.subr.bf16.mxu0 0
    %169 = vmatpush1.bf16.msra.mxu0 0
    %170 = vmatprep.subr.bf16.mxu0 0
    %171 = vmatpush1.bf16.msra.mxu0 0
    %172 = vmatprep.subr.bf16.mxu0 0
    %173 = vmatpush1.bf16.msra.mxu0 0
    %174 = vmatprep.subr.bf16.mxu0 0
    %175 = vmatpush1.bf16.msra.mxu0 0
    %176 = vmatprep.mubr.bf16.mxu0 0
    %177 = vmatmul.mubr.bf16.gmra.mrb[0].mxu0 %v90
    %v178 = vpop.f32.mrb[0].mxu0
    %v179 = vadd.f32 %v95, %v178
    %v180 = vpop.f32.mrb[0].mxu0
    %v181 = vpop.f32.mrb[0].mxu0
    %v182 = vpop.f32.mrb[0].mxu0
    %183 = vdwg.mxu0
    %v184 = vmax.f32 %v179, 0.0
    %v185 = vpack.c.bf16 %v184, %v184
    %v186 = vld [vmem:[%s2 + $0x1] sm:$0x1]
    %v187 = vlaneseq
    %v188 = vshrl.u32 %v187, 7
    %v189 = vsub.s32 0, %v188
    %v190 = vrot.slane %v186, %v189
    %v207 = vunpack.c.l.b16 %v58
    %v208 = vunpack.c.l.b16 %v59
    %v209 = vunpack.c.l.b16 %v60
    %v210 = vunpack.c.l.b16 %v61
    %v211 = vunpack.c.l.b16 %v62
    %v212 = vunpack.c.l.b16 %v63
    %v213 = vunpack.c.l.b16 %v64
    %v214 = vunpack.c.l.b16 %v65
    %v215 = vunpack.c.l.b16 %v66
    %v216 = vunpack.c.l.b16 %v67
    %v217 = vunpack.c.l.b16 %v68
    %v218 = vunpack.c.l.b16 %v69
    %v219 = vunpack.c.l.b16 %v70
    %v220 = vunpack.c.l.b16 %v71
    %v221 = vunpack.c.l.b16 %v72
    %v222 = vunpack.c.l.b16 %v73
    %v223 = vpack.c.b16 %v208, %v207
    %v224 = vpack.c.b16 %v210, %v209
    %v225 = vpack.c.b16 %v212, %v211
    %v226 = vpack.c.b16 %v214, %v213
    %v227 = vpack.c.b16 %v216, %v215
    %v228 = vpack.c.b16 %v218, %v217
    %v229 = vpack.c.b16 %v220, %v219
    %v230 = vpack.c.b16 %v222, %v221
    %239 = vmatprep.subr.bf16.mxu0 0
    %240 = vmatpush1.bf16.msra.mxu0 %v223
    %241 = vmatprep.subr.bf16.mxu0 0
    %242 = vmatpush1.bf16.msra.mxu0 %v224
    %243 = vmatprep.subr.bf16.mxu0 0
    %244 = vmatpush1.bf16.msra.mxu0 %v225
    %245 = vmatprep.subr.bf16.mxu0 0
    %246 = vmatpush1.bf16.msra.mxu0 %v226
    %247 = vmatprep.subr.bf16.mxu0 0
    %248 = vmatpush1.bf16.msra.mxu0 %v227
    %249 = vmatprep.subr.bf16.mxu0 0
    %250 = vmatpush1.bf16.msra.mxu0 %v228
    %251 = vmatprep.subr.bf16.mxu0 0
    %252 = vmatpush1.bf16.msra.mxu0 %v229
    %253 = vmatprep.subr.bf16.mxu0 0
    %254 = vmatpush1.bf16.msra.mxu0 %v230
    %255 = vmatprep.subr.bf16.mxu0 0
    %256 = vmatpush1.bf16.msra.mxu0 0
    %257 = vmatprep.subr.bf16.mxu0 0
    %258 = vmatpush1.bf16.msra.mxu0 0
    %259 = vmatprep.subr.bf16.mxu0 0
    %260 = vmatpush1.bf16.msra.mxu0 0
    %261 = vmatprep.subr.bf16.mxu0 0
    %262 = vmatpush1.bf16.msra.mxu0 0
    %263 = vmatprep.subr.bf16.mxu0 0
    %264 = vmatpush1.bf16.msra.mxu0 0
    %265 = vmatprep.subr.bf16.mxu0 0
    %266 = vmatpush1.bf16.msra.mxu0 0
    %267 = vmatprep.subr.bf16.mxu0 0
    %268 = vmatpush1.bf16.msra.mxu0 0
    %269 = vmatprep.subr.bf16.mxu0 0
    %270 = vmatpush1.bf16.msra.mxu0 0
    %271 = vmatprep.mubr.bf16.mxu0 0
    %272 = vmatmul.mubr.bf16.gmra.mrb[0].mxu0 %v185
    %v273 = vpop.f32.mrb[0].mxu0
    %v274 = vadd.f32 %v190, %v273
    %v275 = vpop.f32.mrb[0].mxu0
    %v276 = vpop.f32.mrb[0].mxu0
    %v277 = vpop.f32.mrb[0].mxu0
    %278 = vdwg.mxu0
    %v279 = vmax.f32 %v274, 0.0
    %v280 = vpack.c.bf16 %v279, %v279
    %v281 = vld [vmem:[%s2 + $0x2] sm:$0x1]
    %v282 = vlaneseq
    %v283 = vshrl.u32 %v282, 7
    %v284 = vsub.s32 0, %v283
    %v285 = vrot.slane %v281, %v284
    %v302 = vunpack.c.l.b16 %v74
    %v303 = vunpack.c.l.b16 %v75
    %v304 = vunpack.c.l.b16 %v76
    %v305 = vunpack.c.l.b16 %v77
    %v306 = vunpack.c.l.b16 %v78
    %v307 = vunpack.c.l.b16 %v79
    %v308 = vunpack.c.l.b16 %v80
    %v309 = vunpack.c.l.b16 %v81
    %v310 = vunpack.c.l.b16 %v82
    %v311 = vunpack.c.l.b16 %v83
    %v312 = vunpack.c.l.b16 %v84
    %v313 = vunpack.c.l.b16 %v85
    %v314 = vunpack.c.l.b16 %v86
    %v315 = vunpack.c.l.b16 %v87
    %v316 = vunpack.c.l.b16 %v88
    %v317 = vunpack.c.l.b16 %v89
    %v318 = vpack.c.b16 %v303, %v302
    %v319 = vpack.c.b16 %v305, %v304
    %v320 = vpack.c.b16 %v307, %v306
    %v321 = vpack.c.b16 %v309, %v308
    %v322 = vpack.c.b16 %v311, %v310
    %v323 = vpack.c.b16 %v313, %v312
    %v324 = vpack.c.b16 %v315, %v314
    %v325 = vpack.c.b16 %v317, %v316
    %334 = vmatprep.subr.bf16.mxu0 0
    %335 = vmatpush1.bf16.msra.mxu0 %v318
    %336 = vmatprep.subr.bf16.mxu0 0
    %337 = vmatpush1.bf16.msra.mxu0 %v319
    %338 = vmatprep.subr.bf16.mxu0 0
    %339 = vmatpush1.bf16.msra.mxu0 %v320
    %340 = vmatprep.subr.bf16.mxu0 0
    %341 = vmatpush1.bf16.msra.mxu0 %v321
    %342 = vmatprep.subr.bf16.mxu0 0
    %343 = vmatpush1.bf16.msra.mxu0 %v322
    %344 = vmatprep.subr.bf16.mxu0 0
    %345 = vmatpush1.bf16.msra.mxu0 %v323
    %346 = vmatprep.subr.bf16.mxu0 0
    %347 = vmatpush1.bf16.msra.mxu0 %v324
    %348 = vmatprep.subr.bf16.mxu0 0
    %349 = vmatpush1.bf16.msra.mxu0 %v325
    %350 = vmatprep.subr.bf16.mxu0 0
    %351 = vmatpush1.bf16.msra.mxu0 0
    %352 = vmatprep.subr.bf16.mxu0 0
    %353 = vmatpush1.bf16.msra.mxu0 0
    %354 = vmatprep.subr.bf16.mxu0 0
    %355 = vmatpush1.bf16.msra.mxu0 0
    %356 = vmatprep.subr.bf16.mxu0 0
    %357 = vmatpush1.bf16.msra.mxu0 0
    %358 = vmatprep.subr.bf16.mxu0 0
    %359 = vmatpush1.bf16.msra.mxu0 0
    %360 = vmatprep.subr.bf16.mxu0 0
    %361 = vmatpush1.bf16.msra.mxu0 0
    %362 = vmatprep.subr.bf16.mxu0 0
    %363 = vmatpush1.bf16.msra.mxu0 0
    %364 = vmatprep.subr.bf16.mxu0 0
    %365 = vmatpush1.bf16.msra.mxu0 0
    %366 = vmatprep.mubr.bf16.mxu0 0
    %367 = vmatmul.mubr.bf16.gmra.mrb[0].mxu0 %v280
    %v368 = vpop.f32.mrb[0].mxu0
    %v369 = vadd.f32 %v285, %v368
    %v370 = vpop.f32.mrb[0].mxu0
    %v371 = vpop.f32.mrb[0].mxu0
    %v372 = vpop.f32.mrb[0].mxu0
    %373 = vdwg.mxu0
    %374 = vst [vmem:[#allocation7] sm:$0xff] %v369
    // Predicated region
    $region22: #{tpu_custom_call.1} parent=1 // pred_check
      _
    $region23: #{tpu_custom_call.1} parent=1 // pred_check_branch
      %376 = sbr.rel (0) target = $region25
    $region24: #{tpu_custom_call.1} parent=1 // pred_region
      %s378 = ssub.s32 128, 128
      %379 = vsyncadd [#allocation4], %s378
      %s381 = sshll.u32 [#allocation7], 4
      %s382 = int_to_ptr.vmem [resolvable:$true] %s381
      %384 = dma.vmem_to_hbm [thread:$0]  %s382, 128, %s3, [#allocation4]
    $region25: #{tpu_custom_call.1} parent=1 // pred_fallthru
      _
    // Predicated region
    $region26: #{tpu_custom_call.1} parent=1 // pred_check
      _
    $region27: #{tpu_custom_call.1} parent=1 // pred_check_branch
      %386 = sbr.rel (0) target = $region29
    $region28: #{tpu_custom_call.1} parent=1 // pred_region
      %387 = dma.done [#allocation4], 128
    $region29: #{tpu_custom_call.1} parent=1 // pred_fallthru
      _
    %388 = vsyncpa [#allocation3], 1
    %389 = vsyncpa [#allocation6], 1
    %390 = vsyncpa [#allocation4], 1

</llo_original>
